<compile_context>
chip_gen: v7x
topology: tpu7x:2x2x1
jax: 0.10.0
libtpu: 0.0.40
codegen_flags: <defaults>
</compile_context>

<pallas_src>
import functools
import math

import jax
import jax.numpy as jnp
from jax.experimental import pallas as pl
from jax.experimental.pallas import tpu as pltpu


_VMEM_BUDGET = 24 * 1024 * 1024   # conservative tile-plan budget (fits all chips)
_VMEM_LIMIT = 32 * 1024 * 1024    # explicit scoped-VMEM limit (<= physical everywhere)


def _round_down(x, m):
    return max(m, (x // m) * m)


def _choose_tiles(b, incoming, outgoing, ep_rows, elem_bytes, out_bytes):
    """Pick (tb, tn, tk) MXU/VMEM-friendly tile sizes."""
    tb = b if b <= 8 else min(256, (b // 8) * 8)
    tn = outgoing if outgoing <= 128 else min(512, (outgoing // 128) * 128)

    def footprint(tb_, tn_, tk_):
        dbl = 2 * (tb_ * tk_ + tk_ * tn_ + ep_rows * tn_) * elem_bytes  # inputs (x2 buf)
        dbl += 2 * tb_ * tn_ * out_bytes                                # output (x2 buf)
        return dbl + tb_ * tn_ * 4                                      # f32 accumulator

    # Full-K slabs unless they blow the VMEM budget; only exact divisors are
    # used for tk so no garbage padding ever enters the reduction.
    tk = incoming
    if footprint(tb, tn, tk) > _VMEM_BUDGET:
        for cand in (2048, 1024, 512, 256, 128):
            if incoming % cand == 0 and footprint(tb, tn, cand) <= _VMEM_BUDGET:
                tk = cand
                break

    # v7x megacore: don't collapse to a single-step grid when N can be split.
    if pl.cdiv(outgoing, tn) * pl.cdiv(b, tb) == 1 and tn > 128:
        tn = _round_down(tn // 2, 128)

    return tb, tn, tk


def _linear_block_kernel(x_ref, w_ref, ep_ref, o_ref, acc_ref, *,
                         neg_slope, batch_norm):
    """One (tb, tn) output tile, accumulated over the K ("arbitrary") grid axis.

    x_ref:   (tb, tk)
    w_ref:   (tk, tn)           transposed Linear weight slab
    ep_ref:  (2, tn) [scale; shift] when batch_norm else (1, tn) [bias]
    o_ref:   (tb, tn)
    acc_ref: (tb, tn) f32 scratch accumulator
    """
    k = pl.program_id(2)

    @pl.when(k == 0)
    def _init():
        acc_ref[...] = jnp.zeros_like(acc_ref)

    acc_ref[...] += jnp.dot(x_ref[...], w_ref[...],
                            preferred_element_type=jnp.float32)

    @pl.when(k == pl.num_programs(2) - 1)
    def _epilogue():
        y = acc_ref[...]
        # Dropout(p=do_rate) in eval mode -> identity.
        if batch_norm:
            # Linear has no bias when batch_norm=True.
            y = jnp.where(y >= 0, y, neg_slope * y)        # LeakyReLU(0.01)
            y = y * ep_ref[0:1, :] + ep_ref[1:2, :]        # folded BN (inference)
        else:
            y = y + ep_ref[0:1, :]                         # Linear bias
            y = jnp.where(y >= 0, y, neg_slope * y)        # LeakyReLU(0.01)
        o_ref[...] = y.astype(o_ref.dtype)


def linear_block(x, w_t, ep, *, batch_norm=True, neg_slope=0.01):
    """Fused LinearBlock forward (eval mode).

    x:   (B, incoming)
    w_t: (incoming, outgoing)   pre-transposed Linear weight
    ep:  (2, outgoing) [scale; shift] if batch_norm else (1, outgoing) [bias]
    """
    b, incoming = x.shape
    incoming_w, outgoing = w_t.shape
    assert incoming_w == incoming
    ep_rows = 2 if batch_norm else 1
    assert ep.shape == (ep_rows, outgoing)

    elem_bytes = jnp.dtype(x.dtype).itemsize
    out_bytes = jnp.dtype(x.dtype).itemsize
    tb, tn, tk = _choose_tiles(b, incoming, outgoing, ep_rows,
                               elem_bytes, out_bytes)

    # Grid order: N outer (weight block constant across the inner B sweep, so
    # Pallas skips the redundant weight DMA), B middle, K (reduction) last.
    grid = (pl.cdiv(outgoing, tn), pl.cdiv(b, tb), pl.cdiv(incoming, tk))

    kernel = functools.partial(_linear_block_kernel,
                               neg_slope=neg_slope, batch_norm=batch_norm)

    return pl.pallas_call(
        kernel,
        out_shape=jax.ShapeDtypeStruct((b, outgoing), x.dtype),
        grid_spec=pltpu.PrefetchScalarGridSpec(
            num_scalar_prefetch=0,
            grid=grid,
            in_specs=[
                pl.BlockSpec((tb, tk), lambda n, i, k: (i, k)),        # x
                pl.BlockSpec((tk, tn), lambda n, i, k: (k, n)),        # W^T
                pl.BlockSpec((ep_rows, tn), lambda n, i, k: (0, n)),   # epilogue vecs
            ],
            out_specs=pl.BlockSpec((tb, tn), lambda n, i, k: (i, n)),
            scratch_shapes=[pltpu.VMEM((tb, tn), jnp.float32)],
        ),
        compiler_params=pltpu.CompilerParams(
            dimension_semantics=("parallel", "parallel", "arbitrary"),
            vmem_limit_bytes=_VMEM_LIMIT),
    )(x, w_t, ep)


class LinearBlockPallas:
    """JAX/Pallas port of LinearBlock (eval / inference mode).

    Defaults match the PyTorch module: do_rate=0.5 (identity in eval),
    batch_norm=True (so the Linear has no bias), activation=LeakyReLU(0.01).
    Weight transpose and BN folding are done ONCE here, not per call.
    """

    def __init__(self, incoming, outgoing, do_rate=0.5, batch_norm=True,
                 neg_slope=0.01, eps=1e-5, key=None, compute_dtype=None):
        self.batch_norm = batch_norm
        self.neg_slope = neg_slope
        # compute_dtype=jnp.bfloat16 halves operand HBM bytes on v6e/v7x;
        # accumulation and the epilogue stay f32 either way.
        self.compute_dtype = compute_dtype

        key = jax.random.PRNGKey(0) if key is None else key
        kw, kb, kg, kbeta, km, kv = jax.random.split(key, 6)
        bound = 1.0 / math.sqrt(incoming)
        w = jax.random.uniform(kw, (outgoing, incoming), jnp.float32,
                               -bound, bound)
        if batch_norm:
            bias = jnp.zeros((outgoing,), jnp.float32)       # unused (no fc bias)
            gamma = 1.0 + 0.1 * jax.random.normal(kg, (outgoing,), jnp.float32)
            beta = 0.1 * jax.random.normal(kbeta, (outgoing,), jnp.float32)
            mean = 0.1 * jax.random.normal(km, (outgoing,), jnp.float32)
            var = jax.random.uniform(kv, (outgoing,), jnp.float32, 0.5, 1.5)
        else:
            bias = jax.random.uniform(kb, (outgoing,), jnp.float32, -bound, bound)
            gamma = jnp.ones((outgoing,), jnp.float32)
            beta = jnp.zeros((outgoing,), jnp.float32)
            mean = jnp.zeros((outgoing,), jnp.float32)
            var = jnp.ones((outgoing,), jnp.float32)
        self.raw_params = (w, bias, gamma, beta, mean, var)

        # Pre-transpose / pre-fold (host side, once at init).
        w_t = jnp.transpose(w)                               # (incoming, outgoing)
        if compute_dtype is not None:
            w_t = w_t.astype(compute_dtype)
        self.w_t = w_t
        if batch_norm:
            scale = gamma / jnp.sqrt(var + eps)
            shift = beta - mean * scale
            self.ep = jnp.stack([scale, shift]).astype(jnp.float32)   # (2, outgoing)
        else:
            self.ep = bias.reshape(1, outgoing).astype(jnp.float32)   # (1, outgoing)

    def __call__(self, x):
        if self.compute_dtype is not None:
            x = x.astype(self.compute_dtype)
        return linear_block(x, self.w_t, self.ep,
                            batch_norm=self.batch_norm,
                            neg_slope=self.neg_slope)


def reference_forward(x, params, *, batch_norm=True, neg_slope=0.01, eps=1e-5):
    """Pure-JAX reference matching the PyTorch forward in eval mode."""
    w, bias, gamma, beta, mean, var = params
    y = x @ w.T
    if not batch_norm:
        y = y + bias
    # Dropout in eval mode -> identity.
    y = jnp.where(y >= 0, y, neg_slope * y)
    if batch_norm:
        y = (y - mean) / jnp.sqrt(var + eps) * gamma + beta
    return y


if __name__ == "__main__":
    key = jax.random.PRNGKey(0)
    kx1, kp1, kx2, kp2 = jax.random.split(key, 4)

    # Test 1: default batch_norm=True path (B=16, incoming=64, outgoing=256).
    B, INCOMING, OUTGOING = 16, 64, 256
    x = jax.random.normal(kx1, (B, INCOMING), jnp.float32)
    block = LinearBlockPallas(INCOMING, OUTGOING, key=kp1)
    out = jax.block_until_ready(block(x))
    assert out.shape == (B, OUTGOING), out.shape
    ref = reference_forward(x, block.raw_params, batch_norm=True)
    assert jnp.allclose(out, ref, atol=1e-4, rtol=1e-4), (
        float(jnp.max(jnp.abs(out - ref))))

    # Test 2: batch_norm=False (Linear bias) path + shapes that are NOT tile
    # multiples, exercising masked writeback of partial B / N blocks.
    B2, IN2, OUT2 = 12, 64, 192
    x2 = jax.random.normal(kx2, (B2, IN2), jnp.float32)
    block2 = LinearBlockPallas(IN2, OUT2, batch_norm=False, key=kp2)
    out2 = jax.block_until_ready(block2(x2))
    assert out2.shape == (B2, OUT2), out2.shape
    ref2 = reference_forward(x2, block2.raw_params, batch_norm=False)
    assert jnp.allclose(out2, ref2, atol=1e-4, rtol=1e-4), (
        float(jnp.max(jnp.abs(out2 - ref2))))

    # TODO(synk): training-mode Dropout / batch-statistics BatchNorm are not
    # emitted; this kernel implements the inference (eval) forward pass.
    print("KERNEL_OK")
</pallas_src>

<mosaic_0001>
module attributes {stable_mosaic.version = 11 : i64} {
  func.func @_linear_block_kernel(%arg0: i32, %arg1: i32, %arg2: i32, %arg3: memref<16x64xf32, #tpu.memory_space<vmem>>, %arg4: memref<64x128xf32, #tpu.memory_space<vmem>>, %arg5: memref<2x128xf32, #tpu.memory_space<vmem>>, %arg6: memref<16x128xf32, #tpu.memory_space<vmem>>, %arg7: memref<16x128xf32, #tpu.memory_space<vmem>>) attributes {dimension_semantics = [#tpu.dimension_semantics<parallel>, #tpu.dimension_semantics<parallel>, #tpu.dimension_semantics<arbitrary>], iteration_bounds = array<i64: 2, 1, 1>, scalar_prefetch = 0 : i64, scratch_operands = 1 : i64, tpu.core_type = #tpu.core_type<tc>, window_params = [{transform_indices = @transform_0, window_bounds = array<i64: 16, 64>}, {transform_indices = @transform_1, window_bounds = array<i64: 64, 128>}, {transform_indices = @transform_2, window_bounds = array<i64: 2, 128>}, {transform_indices = @transform_3, window_bounds = array<i64: 16, 128>}]} {
    %c0_i32 = arith.constant 0 : i32
    %0 = arith.cmpi eq, %arg2, %c0_i32 : i32
    %1 = arith.extui %0 : i1 to i32
    %c0_i32_0 = arith.constant 0 : i32
    %2 = arith.cmpi ne, %1, %c0_i32_0 : i32
    scf.if %2 {
      %cst_10 = arith.constant 0.000000e+00 : f32
      %12 = vector.broadcast %cst_10 : f32 to vector<16x128xf32>
      %c0_11 = arith.constant 0 : index
      %c0_12 = arith.constant 0 : index
      %13 = vector.load %arg7[%c0_11, %c0_12] : memref<16x128xf32, #tpu.memory_space<vmem>>, vector<16x128xf32>
      tpu.vector_store %arg7[%c0_11, %c0_12], %12 {strides = array<i32>} : memref<16x128xf32, #tpu.memory_space<vmem>>, vector<16x128xf32>,
    } else {
    }
    %c0 = arith.constant 0 : index
    %c0_1 = arith.constant 0 : index
    %3 = vector.load %arg7[%c0, %c0_1] : memref<16x128xf32, #tpu.memory_space<vmem>>, vector<16x128xf32>
    %c0_2 = arith.constant 0 : index
    %c0_3 = arith.constant 0 : index
    %4 = vector.load %arg3[%c0_2, %c0_3] : memref<16x64xf32, #tpu.memory_space<vmem>>, vector<16x64xf32>
    %c0_4 = arith.constant 0 : index
    %c0_5 = arith.constant 0 : index
    %5 = vector.load %arg4[%c0_4, %c0_5] : memref<64x128xf32, #tpu.memory_space<vmem>>, vector<64x128xf32>
    %cst = arith.constant dense<0.000000e+00> : vector<16x128xf32>
    %6 = tpu.matmul %4, %5, %cst {dimension_numbers = #tpu.dot_dimension_numbers<[1], [0], [0], [1], [0, 0, 1, 1], [], []>} : vector<16x64xf32>, vector<64x128xf32>, vector<16x128xf32> -> vector<16x128xf32>
    %7 = arith.addf %3, %6 : vector<16x128xf32>
    %c0_6 = arith.constant 0 : index
    %c0_7 = arith.constant 0 : index
    %8 = vector.load %arg7[%c0_6, %c0_7] : memref<16x128xf32, #tpu.memory_space<vmem>>, vector<16x128xf32>
    tpu.vector_store %arg7[%c0_6, %c0_7], %7 {strides = array<i32>} : memref<16x128xf32, #tpu.memory_space<vmem>>, vector<16x128xf32>,
    %c0_i32_8 = arith.constant 0 : i32
    %9 = arith.cmpi eq, %arg2, %c0_i32_8 : i32
    %10 = arith.extui %9 : i1 to i32
    %c0_i32_9 = arith.constant 0 : i32
    %11 = arith.cmpi ne, %10, %c0_i32_9 : i32
    scf.if %11 {
      %c0_10 = arith.constant 0 : index
      %c0_11 = arith.constant 0 : index
      %12 = vector.load %arg7[%c0_10, %c0_11] : memref<16x128xf32, #tpu.memory_space<vmem>>, vector<16x128xf32>
      %cst_12 = arith.constant 0.000000e+00 : f32
      %13 = vector.broadcast %cst_12 : f32 to vector<16x128xf32>
      %14 = arith.cmpf oge, %12, %13 : vector<16x128xf32>
      %cst_13 = arith.constant 0.00999999977 : f32
      %15 = vector.broadcast %cst_13 : f32 to vector<16x128xf32>
      %16 = arith.mulf %15, %12 : vector<16x128xf32>
      %17 = arith.select %14, %12, %16 : vector<16x128xi1>, vector<16x128xf32>
      %c0_14 = arith.constant 0 : index
      %c0_15 = arith.constant 0 : index
      %18 = vector.load %arg5[%c0_14, %c0_15] : memref<2x128xf32, #tpu.memory_space<vmem>>, vector<1x128xf32>
      %19 = vector.broadcast %18 : vector<1x128xf32> to vector<16x128xf32>
      %20 = arith.mulf %17, %19 : vector<16x128xf32>
      %c1 = arith.constant 1 : index
      %c0_16 = arith.constant 0 : index
      %21 = vector.load %arg5[%c1, %c0_16] : memref<2x128xf32, #tpu.memory_space<vmem>>, vector<1x128xf32>
      %22 = vector.broadcast %21 : vector<1x128xf32> to vector<16x128xf32>
      %23 = arith.addf %20, %22 : vector<16x128xf32>
      %c0_17 = arith.constant 0 : index
      %c0_18 = arith.constant 0 : index
      %24 = vector.load %arg6[%c0_17, %c0_18] : memref<16x128xf32, #tpu.memory_space<vmem>>, vector<16x128xf32>
      tpu.vector_store %arg6[%c0_17, %c0_18], %23 {strides = array<i32>} : memref<16x128xf32, #tpu.memory_space<vmem>>, vector<16x128xf32>,
    } else {
    }
    return
  }
  func.func @transform_0(%arg0: i32, %arg1: i32, %arg2: i32) -> (i32, i32) {
    %c0_i32 = arith.constant 0 : i32
    return %arg1, %arg2 : i32, i32
  }
  func.func @transform_1(%arg0: i32, %arg1: i32, %arg2: i32) -> (i32, i32) {
    %c0_i32 = arith.constant 0 : i32
    return %arg2, %arg0 : i32, i32
  }
  func.func @transform_2(%arg0: i32, %arg1: i32, %arg2: i32) -> (i32, i32) {
    %c0_i32 = arith.constant 0 : i32
    %c0_i32_0 = arith.constant 0 : i32
    return %c0_i32, %arg0 : i32, i32
  }
  func.func @transform_3(%arg0: i32, %arg1: i32, %arg2: i32) -> (i32, i32) {
    %c0_i32 = arith.constant 0 : i32
    return %arg1, %arg0 : i32, i32
  }
}

</mosaic_0001>

<llo_original>
// kernel: tpu_custom_call.1
$region0: #{tpu_custom_call.1}
  #allocation0 [shape = 'u32[]', space=smem, size = 0x4, offset = 0x4, fixed_abs, tag = 'smem constant byte address 0x4 - core index']
  #allocation1 [shape = 'u32[144,128]{1,0:T(1,128)}', space=vmem, size = 0x12000, scoped, tag = 'internal scratch']
  #allocation2 [shape = 'f32[16,128]{1,0:T(8,128)}', space=vmem, size = 0x2000, scoped, tag = 'scratch operand']
  %s0 = inlined_call_operand.hbm [shape: f32[16,64], index: 0, kind: input, shape index: {}]
  %s1 = inlined_call_operand.hbm [shape: f32[64,256], index: 1, kind: input, shape index: {}]
  %s2 = inlined_call_operand.vmem [shape: f32[2,256], index: 2, kind: input, shape index: {}]
  %s3 = inlined_call_operand.hbm [shape: f32[16,256], index: 3, kind: output, shape index: {}]
  %s4 = sld [smem:[#allocation0]]
  $region61: #{tpu_custom_call.1} parent=0
    _
  %s6 = ssub.s32 1, %s4
  %s7 = scalar_select 0, %s6, %s4
  $region1: #{tpu_custom_call.1} parent=0
    #allocation3 [shape = 'u8[8192]{0}', space=vmem, size = 0x2000, scoped, tag = 'input window, operand 0, single buffered']
    #allocation4 [shape = 's32[2]{0}', space=sflag, size = 0x8, scoped, tag = 'scoped memory for tpu_custom_call.1']
    #allocation5 [shape = 's32[2]{0}', space=sflag, size = 0x8, scoped, tag = 'scoped memory for tpu_custom_call.1']
    #allocation6 [shape = 'u8[65536]{0}', space=vmem, size = 0x10000, scoped, tag = 'input window, operand 1']
    #allocation7 [shape = 's32[2]{0}', space=sflag, size = 0x8, scoped, tag = 'scoped memory for tpu_custom_call.1']
    #allocation8 [shape = 'u8[16384]{0}', space=vmem, size = 0x4000, scoped, tag = 'output window, operand 0']
    %8 = vsyncpa [#allocation4], 0
    %9 = vsyncpa [#allocation7], 0
    %s10 = scalar_lea.sflag [#allocation7], 1
    %11 = vsyncpa %s10, 0
    %12 = vsyncpa [#allocation5], 0
    %s13 = scalar_lea.sflag [#allocation5], 1
    %14 = vsyncpa %s13, 0
    loop: start=0, step=1, limit=4
    $region2: #{tpu_custom_call.1} parent=1 // loop_pre_header
      _
    $region3: #{tpu_custom_call.1} parent=1 // loop_header
      %s16 = sphi 0, %s20
      %p17 = scmp.ge.s32.totalorder %s16, 4
      %s23 = sphi 0, %s42
      %s24 = sphi 0, %s38
      %s25 = sphi 0, %s34
      %s26 = sphi 0, %s23
      %s27 = sphi 0, %s24
      %s28 = sphi 0, %s25
      %s29 = sphi 0, %s26
      %s30 = sphi 0, %s27
      %s31 = sphi 0, %s28
      %s47 = sphi 0, %s49
      %s50 = sphi 0, %s47
      %s51 = sphi 0, %s50
      %s67 = sphi 0, %s51
      %s75 = sphi 0, %s77
      %s78 = sphi 0, %s75
      %s79 = sphi 0, %s78
      %s95 = sphi 0, %s79
      %s101 = sphi 0, %s103
      %s104 = sphi 0, %s101
      %s105 = sphi 0, %s104
      %s121 = sphi 0, %s105
      %s129 = sphi 0, %s131
      %s132 = sphi 0, %s129
      %s133 = sphi 0, %s132
      %s149 = sphi 0, %s133
    $region4: #{tpu_custom_call.1} parent=1 // loop_header_branch
      %19 = sbr.rel (%p17) target = $region8
    $region5: #{tpu_custom_call.1} parent=1 // loop_body
      %s21 = ssub.s32 %s16, 1
      %s22 = ssub.s32 %s16, 2
      %s32 = sadd.s32 1, %s25
      %p33 = scmp.ge.s32.totalorder %s32, 1
      %s34 = scalar_select %p33, 0, %s32
      %s35 = sadd.s32 1, %s24
      %s36 = scalar_select %p33, %s35, %s24
      %p37 = scmp.ge.s32.totalorder %s36, 1
      %s38 = scalar_select %p37, 0, %s36
      %s39 = sadd.s32 1, %s23
      %s40 = scalar_select %p37, %s39, %s23
      %p41 = scmp.ge.s32.totalorder %s40, 2
      %s42 = scalar_select %p41, 0, %s40
      %s43 = ssub.s32 %s24, %s38
      %s44 = ssub.s32 %s25, %s34
      %s45 = sor.u32 %s43, %s44
      %p46 = scmp.eq.s32.totalorder %s45, 0
      %s48 = sadd.s32 %s47, 1
      %s49 = scalar_select %p46, %s47, %s48
      %p52 = pneg %p46
      %p53 = scmp.eq.s32.totalorder %s16, 1
      %p54 = por %p52, %p53
      %p55 = scmp.ne.s32.totalorder %s47, %s50
      %p56 = scmp.eq.s32.totalorder %s16, 0
      %p57 = por %p55, %p56
      %p58 = scmp.ne.s32.totalorder %s47, %s50
      %p59 = scmp.eq.s32.totalorder %s21, 1
      %p60 = por %p58, %p59
      %p61 = scmp.ne.s32.totalorder %s50, %s51
      %p62 = scmp.eq.s32.totalorder %s21, 0
      %p63 = por %p61, %p62
      %p64 = scmp.ne.s32.totalorder %s50, %s51
      %p65 = scmp.eq.s32.totalorder %s22, 1
      %p66 = por %p64, %p65
      %p68 = scmp.ne.s32.totalorder %s51, %s67
      %p69 = scmp.eq.s32.totalorder %s22, 0
      %p70 = por %p68, %p69
      %s71 = ssub.s32 %s25, %s34
      %s72 = ssub.s32 %s23, %s42
      %s73 = sor.u32 %s71, %s72
      %p74 = scmp.eq.s32.totalorder %s73, 0
      %s76 = sadd.s32 %s75, 1
      %s77 = scalar_select %p74, %s75, %s76
      %p80 = pneg %p74
      %p81 = scmp.eq.s32.totalorder %s16, 1
      %p82 = por %p80, %p81
      %p83 = scmp.ne.s32.totalorder %s75, %s78
      %p84 = scmp.eq.s32.totalorder %s16, 0
      %p85 = por %p83, %p84
      %p86 = scmp.ne.s32.totalorder %s75, %s78
      %p87 = scmp.eq.s32.totalorder %s21, 1
      %p88 = por %p86, %p87
      %p89 = scmp.ne.s32.totalorder %s78, %s79
      %p90 = scmp.eq.s32.totalorder %s21, 0
      %p91 = por %p89, %p90
      %p92 = scmp.ne.s32.totalorder %s78, %s79
      %p93 = scmp.eq.s32.totalorder %s22, 1
      %p94 = por %p92, %p93
      %p96 = scmp.ne.s32.totalorder %s79, %s95
      %p97 = scmp.eq.s32.totalorder %s22, 0
      %p98 = por %p96, %p97
      %s99 = ssub.s32 %s23, %s42
      %p100 = scmp.eq.s32.totalorder %s99, 0
      %s102 = sadd.s32 %s101, 1
      %s103 = scalar_select %p100, %s101, %s102
      %p106 = pneg %p100
      %p107 = scmp.eq.s32.totalorder %s16, 1
      %p108 = por %p106, %p107
      %p109 = scmp.ne.s32.totalorder %s101, %s104
      %p110 = scmp.eq.s32.totalorder %s16, 0
      %p111 = por %p109, %p110
      %p112 = scmp.ne.s32.totalorder %s101, %s104
      %p113 = scmp.eq.s32.totalorder %s21, 1
      %p114 = por %p112, %p113
      %p115 = scmp.ne.s32.totalorder %s104, %s105
      %p116 = scmp.eq.s32.totalorder %s21, 0
      %p117 = por %p115, %p116
      %p118 = scmp.ne.s32.totalorder %s104, %s105
      %p119 = scmp.eq.s32.totalorder %s22, 1
      %p120 = por %p118, %p119
      %p122 = scmp.ne.s32.totalorder %s105, %s121
      %p123 = scmp.eq.s32.totalorder %s22, 0
      %p124 = por %p122, %p123
      %s125 = ssub.s32 %s24, %s38
      %s126 = ssub.s32 %s23, %s42
      %s127 = sor.u32 %s125, %s126
      %p128 = scmp.eq.s32.totalorder %s127, 0
      %s130 = sadd.s32 %s129, 1
      %s131 = scalar_select %p128, %s129, %s130
      %p134 = pneg %p128
      %p135 = scmp.eq.s32.totalorder %s16, 1
      %p136 = por %p134, %p135
      %p137 = scmp.ne.s32.totalorder %s129, %s132
      %p138 = scmp.eq.s32.totalorder %s16, 0
      %p139 = por %p137, %p138
      %p140 = scmp.ne.s32.totalorder %s129, %s132
      %p141 = scmp.eq.s32.totalorder %s21, 1
      %p142 = por %p140, %p141
      %p143 = scmp.ne.s32.totalorder %s132, %s133
      %p144 = scmp.eq.s32.totalorder %s21, 0
      %p145 = por %p143, %p144
      %p146 = scmp.ne.s32.totalorder %s132, %s133
      %p147 = scmp.eq.s32.totalorder %s22, 1
      %p148 = por %p146, %p147
      %p150 = scmp.ne.s32.totalorder %s133, %s149
      %p151 = scmp.eq.s32.totalorder %s22, 0
      %p152 = por %p150, %p151
      %p153 = scmp.le.s32.totalorder 1, %s16
      %p154 = scmp.lt.s32.totalorder %s16, 3
      %p155 = pnand %p153, %p154
      %p156 = pneg %p155
      // Predicated region
      $region9: #{tpu_custom_call.1} parent=5 // pred_check
        _
      $region10: #{tpu_custom_call.1} parent=5 // pred_check_branch
        %158 = sbr.rel (%p155) target = $region12
      $region11: #{tpu_custom_call.1} parent=5 // pred_region
        %s159 = ssub.s32 %s16, 1
        // Predicated region
        $region13: #{tpu_custom_call.1} parent=11 // pred_check
          %p160 = pneg %p63
        $region14: #{tpu_custom_call.1} parent=11 // pred_check_branch
          %162 = sbr.rel (%p160) target = $region16
        $region15: #{tpu_custom_call.1} parent=11 // pred_region
          %s163 = smul.u32 2, %s27
          %s165 = ssub.s32 256, 256
          %166 = vsyncadd [#allocation4], %s165
          %s167 = sadd.s32 %s28, %s163
          %s168 = smul.addr %s167, 128
          %s169 = scalar_lea.hbm %s0, %s168
          %s170 = sshll.u32 [#allocation3], 4
          %s171 = int_to_ptr.vmem [resolvable:$true] %s170
          %176 = dma.hbm_to_vmem [thread:$0]  %s169, 256, %s171, [#allocation4], 128, 128, 8
        $region16: #{tpu_custom_call.1} parent=11 // pred_fallthru
          _
      $region12: #{tpu_custom_call.1} parent=5 // pred_fallthru
        _
      %p177 = scmp.lt.s32.totalorder %s16, 2
      // Predicated region
      $region17: #{tpu_custom_call.1} parent=5 // pred_check
        %p178 = pneg %p177
      $region18: #{tpu_custom_call.1} parent=5 // pred_check_branch
        %180 = sbr.rel (%p178) target = $region20
      $region19: #{tpu_custom_call.1} parent=5 // pred_region
        // Predicated region
        $region21: #{tpu_custom_call.1} parent=19 // pred_check
          %p181 = pneg %p85
        $region22: #{tpu_custom_call.1} parent=19 // pred_check_branch
          %183 = sbr.rel (%p181) target = $region24
        $region23: #{tpu_custom_call.1} parent=19 // pred_region
          %s184 = sand.u32 %s75, 1
          %s185 = scalar_lea.sflag [#allocation7], %s184
          %s186 = sand.u32 %s75, 1
          %s187 = smul.addr %s186, 64
          %s188 = scalar_lea.vmem [#allocation6], %s187
          %s189 = smul.u32 8, %s25
          %s191 = ssub.s32 1024, 1024
          %192 = vsyncadd %s185, %s191
          %s193 = smul.addr %s189, 2
          %s194 = sadd.s32 %s23, %s193
          %s195 = smul.addr %s194, 128
          %s196 = scalar_lea.hbm %s1, %s195
          %s197 = sshll.u32 %s188, 4
          %s198 = int_to_ptr.vmem [resolvable:$true] %s197
          %203 = dma.hbm_to_vmem [thread:$0]  %s196, 1024, %s198, %s185, 256, 128, 8
        $region24: #{tpu_custom_call.1} parent=19 // pred_fallthru
          _
        // Predicated region
        $region25: #{tpu_custom_call.1} parent=19 // pred_check
          %p204 = pneg %p111
        $region26: #{tpu_custom_call.1} parent=19 // pred_check_branch
          %206 = sbr.rel (%p204) target = $region28
        $region27: #{tpu_custom_call.1} parent=19 // pred_region
          %p207 = scmp.lt.s32.totalorder %s23, 1
          %s208 = scalar_select %p207, %s23, 1
          %s209 = smul.addr %s208, 2
          %s210 = scalar_lea.vmem %s2, %s209
        $region28: #{tpu_custom_call.1} parent=19 // pred_fallthru
          _
      $region20: #{tpu_custom_call.1} parent=5 // pred_fallthru
        _
      %p211 = scmp.le.s32.totalorder 1, %s16
      %p212 = scmp.lt.s32.totalorder %s16, 3
      %p213 = pnand %p211, %p212
      %p214 = pneg %p213
      // Predicated region
      $region29: #{tpu_custom_call.1} parent=5 // pred_check
        _
      $region30: #{tpu_custom_call.1} parent=5 // pred_check_branch
        %216 = sbr.rel (%p213) target = $region32
      $region31: #{tpu_custom_call.1} parent=5 // pred_region
        %s217 = ssub.s32 %s16, 1
        // Predicated region
        $region33: #{tpu_custom_call.1} parent=31 // pred_check
          %p218 = pneg %p63
        $region34: #{tpu_custom_call.1} parent=31 // pred_check_branch
          %220 = sbr.rel (%p218) target = $region36
        $region35: #{tpu_custom_call.1} parent=31 // pred_region
          %221 = dma.done [#allocation4], 256
        $region36: #{tpu_custom_call.1} parent=31 // pred_fallthru
          _
        %s222 = sand.u32 %s78, 1
        %s223 = scalar_lea.sflag [#allocation7], %s222
        %s224 = sand.u32 %s78, 1
        %s225 = smul.addr %s224, 64
        %s226 = scalar_lea.vmem [#allocation6], %s225
        // Predicated region
        $region37: #{tpu_custom_call.1} parent=31 // pred_check
          %p227 = pneg %p91
        $region38: #{tpu_custom_call.1} parent=31 // pred_check_branch
          %229 = sbr.rel (%p227) target = $region40
        $region39: #{tpu_custom_call.1} parent=31 // pred_region
          %230 = dma.done %s223, 1024
        $region40: #{tpu_custom_call.1} parent=31 // pred_fallthru
          _
        %p231 = pneg %p63
        %p232 = pneg %p60
        %s233 = sand.u32 %s78, 1
        %s234 = scalar_lea.sflag [#allocation7], %s233
        %s235 = sand.u32 %s78, 1
        %s236 = smul.addr %s235, 64
        %s237 = scalar_lea.vmem [#allocation6], %s236
        %p238 = pneg %p91
        %p239 = pneg %p88
        %p240 = scmp.lt.s32.totalorder %s26, 1
        %s241 = scalar_select %p240, %s26, 1
        %s242 = smul.addr %s241, 2
        %s243 = scalar_lea.vmem %s2, %s242
        %p244 = pneg %p117
        %p245 = pneg %p114
        %p246 = pneg %p145
        %p247 = pneg %p142
        %s248 = sand.u32 %s132, 1
        %s249 = scalar_lea.sflag [#allocation5], %s248
        %s250 = sand.u32 %s132, 1
        %s251 = smul.addr %s250, 16
        %s252 = scalar_lea.vmem [#allocation8], %s251
        %s253 = smul.u32 2, %s27
        %s254 = smul.u32 8, %s28
        %p255 = scmp.lt.s32.totalorder %s26, 1
        %s256 = scalar_select %p255, %s26, 1
        %s257 = smul.addr %s256, 2
        %s258 = scalar_lea.vmem %s2, %s257
        %s259 = smul.u32 2, %s27
        %p260 = scmp.eq.s32.totalorder %s28, 0
        // Predicated region
        $region41: #{tpu_custom_call.1} parent=31 // pred_check
          %p261 = pneg %p260
        $region42: #{tpu_custom_call.1} parent=31 // pred_check_branch
          %263 = sbr.rel (%p261) target = $region44
        $region43: #{tpu_custom_call.1} parent=31 // pred_region
          %264 = vst [vmem:[#allocation2] sm:$0xff] 0.0
          %265 = vst [vmem:[#allocation2 + $0x8] sm:$0xff] 0.0
        $region44: #{tpu_custom_call.1} parent=31 // pred_fallthru
          _
        %v266 = vld [vmem:[#allocation2] sm:$0xff]
        %v267 = vld [vmem:[#allocation2 + $0x8] sm:$0xff]
        %v268 = vld [vmem:[#allocation3] sm:$0xff]
        %v269 = vld [vmem:[#allocation3 + $0x8] sm:$0xff]
        %v270 = vld [vmem:[%s226] sm:$0xff]
        %v271 = vld [vmem:[%s226 + $0x8] sm:$0xff]
        %v272 = vld [vmem:[%s226 + $0x10] sm:$0xff]
        %v273 = vld [vmem:[%s226 + $0x18] sm:$0xff]
        %v274 = vld [vmem:[%s226 + $0x20] sm:$0xff]
        %v275 = vld [vmem:[%s226 + $0x28] sm:$0xff]
        %v276 = vld [vmem:[%s226 + $0x30] sm:$0xff]
        %v277 = vld [vmem:[%s226 + $0x38] sm:$0xff]
        %vm278 = vcmask 523264
        %v280 = vsel %vm278, %v268, 0
        %v283 = vsel %vm278, %v269, 0
        %285 = vmatprep.subr.mxu0 0.0
        %286 = vmatpush1.msra.mxu0 %v270
        %287 = vmatprep.subr.mxu0 0.0
        %288 = vmatpush1.msra.mxu0 %v271
        %289 = vmatprep.subr.mxu0 0.0
        %290 = vmatpush1.msra.mxu0 %v272
        %291 = vmatprep.subr.mxu0 0.0
        %292 = vmatpush1.msra.mxu0 %v273
        %293 = vmatprep.subr.mxu0 0.0
        %294 = vmatpush1.msra.mxu0 %v274
        %295 = vmatprep.subr.mxu0 0.0
        %296 = vmatpush1.msra.mxu0 %v275
        %297 = vmatprep.subr.mxu0 0.0
        %298 = vmatpush1.msra.mxu0 %v276
        %299 = vmatprep.subr.mxu0 0.0
        %300 = vmatpush1.msra.mxu0 %v277
        %301 = vmatprep.subr.mxu0 0.0
        %302 = vmatpush1.msra.mxu0 0.0
        %303 = vmatprep.subr.mxu0 0.0
        %304 = vmatpush1.msra.mxu0 0.0
        %305 = vmatprep.subr.mxu0 0.0
        %306 = vmatpush1.msra.mxu0 0.0
        %307 = vmatprep.subr.mxu0 0.0
        %308 = vmatpush1.msra.mxu0 0.0
        %309 = vmatprep.subr.mxu0 0.0
        %310 = vmatpush1.msra.mxu0 0.0
        %311 = vmatprep.subr.mxu0 0.0
        %312 = vmatpush1.msra.mxu0 0.0
        %313 = vmatprep.subr.mxu0 0.0
        %314 = vmatpush1.msra.mxu0 0.0
        %315 = vmatprep.subr.mxu0 0.0
        %316 = vmatpush1.msra.mxu0 0.0
        %317 = vmatprep.subr.mxu0 0.0
        %318 = vmatpush1.msra.mxu0 0.0
        %319 = vmatprep.subr.mxu0 0.0
        %320 = vmatpush1.msra.mxu0 0.0
        %321 = vmatprep.subr.mxu0 0.0
        %322 = vmatpush1.msra.mxu0 0.0
        %323 = vmatprep.subr.mxu0 0.0
        %324 = vmatpush1.msra.mxu0 0.0
        %325 = vmatprep.subr.mxu0 0.0
        %326 = vmatpush1.msra.mxu0 0.0
        %327 = vmatprep.subr.mxu0 0.0
        %328 = vmatpush1.msra.mxu0 0.0
        %329 = vmatprep.subr.mxu0 0.0
        %330 = vmatpush1.msra.mxu0 0.0
        %331 = vmatprep.subr.mxu0 0.0
        %332 = vmatpush1.msra.mxu0 0.0
        %333 = vmatprep.subr.mxu0 0.0
        %334 = vmatpush1.msra.mxu0 0.0
        %335 = vmatprep.subr.mxu0 0.0
        %336 = vmatpush1.msra.mxu0 0.0
        %337 = vmatprep.subr.mxu0 0.0
        %338 = vmatpush1.msra.mxu0 0.0
        %339 = vmatprep.subr.mxu0 0.0
        %340 = vmatpush1.msra.mxu0 0.0
        %341 = vmatprep.subr.mxu0 0.0
        %342 = vmatpush1.msra.mxu0 0.0
        %343 = vmatprep.subr.mxu0 0.0
        %344 = vmatpush1.msra.mxu0 0.0
        %345 = vmatprep.subr.mxu0 0.0
        %346 = vmatpush1.msra.mxu0 0.0
        %347 = vmatprep.subr.mxu0 0.0
        %348 = vmatpush1.msra.mxu0 0.0
        %349 = vmatprep.mubr.f32.mxu0 0.0
        %350 = vmatmul.mubr.f32.gmra.mrb[0].mxu0 %v280
        %v351 = vpop.f32.mrb[0].mxu0
        %v352 = vadd.f32 0.0, %v351
        %v353 = vpop.f32.mrb[0].mxu0
        %354 = vmatprep.mubr.f32.mxu0 0.0
        %355 = vmatmul.mubr.f32.gmra.mrb[0].mxu0 %v283
        %v356 = vpop.f32.mrb[0].mxu0
        %v357 = vadd.f32 0.0, %v356
        %v358 = vpop.f32.mrb[0].mxu0
        %359 = vdwg.mxu0
        %v360 = vadd.f32 %v266, %v352
        %v361 = vadd.f32 %v267, %v357
        %362 = vst [vmem:[#allocation2] sm:$0xff] %v360
        %363 = vst [vmem:[#allocation2 + $0x8] sm:$0xff] %v361
        // Predicated region
        $region45: #{tpu_custom_call.1} parent=31 // pred_check
          %p364 = pneg %p260
        $region46: #{tpu_custom_call.1} parent=31 // pred_check_branch
          %366 = sbr.rel (%p364) target = $region48
        $region47: #{tpu_custom_call.1} parent=31 // pred_region
          %v367 = vld [vmem:[#allocation2] sm:$0xff]
          %v368 = vld [vmem:[#allocation2 + $0x8] sm:$0xff]
          %vm369 = vcmp.ge.f32.partialorder %v367, 0.0
          %vm370 = vcmp.ge.f32.partialorder %v368, 0.0
          %v371 = vmul.f32 %v367, 0.01
          %v372 = vmul.f32 %v368, 0.01
          %v373 = vsel %vm369, %v367, %v371
          %v374 = vsel %vm370, %v368, %v372
          %v375 = vld [vmem:[%s258] sm:$0x1]
          %v376 = vlaneseq
          %v377 = vshrl.u32 %v376, 7
          %v378 = vsub.s32 0, %v377
          %v379 = vrot.slane %v375, %v378
          %v380 = vmul.f32 %v373, %v379
          %v381 = vmul.f32 %v374, %v379
          %v382 = vld [vmem:[%s258 + $0x1] sm:$0x1]
          %v383 = vlaneseq
          %v384 = vshrl.u32 %v383, 7
          %v385 = vsub.s32 0, %v384
          %v386 = vrot.slane %v382, %v385
          %v387 = vadd.f32 %v380, %v386
          %v388 = vadd.f32 %v381, %v386
          %389 = vst [vmem:[%s252] sm:$0xff] %v387
          %390 = vst [vmem:[%s252 + $0x8] sm:$0xff] %v388
        $region48: #{tpu_custom_call.1} parent=31 // pred_fallthru
          _
        %s391 = sand.u32 %s132, 1
        %s392 = scalar_lea.sflag [#allocation5], %s391
        %s393 = sand.u32 %s132, 1
        %s394 = smul.addr %s393, 16
        %s395 = scalar_lea.vmem [#allocation8], %s394
        // Predicated region
        $region49: #{tpu_custom_call.1} parent=31 // pred_check
          %p396 = pneg %p142
        $region50: #{tpu_custom_call.1} parent=31 // pred_check_branch
          %398 = sbr.rel (%p396) target = $region52
        $region51: #{tpu_custom_call.1} parent=31 // pred_region
          %s399 = smul.u32 2, %s27
          %s401 = ssub.s32 256, 256
          %402 = vsyncadd %s392, %s401
          %s403 = smul.addr %s399, 2
          %s404 = sadd.s32 %s26, %s403
          %s405 = smul.addr %s404, 128
          %s406 = scalar_lea.hbm %s3, %s405
          %s407 = sshll.u32 %s395, 4
          %s408 = int_to_ptr.vmem [resolvable:$true] %s407
          %413 = dma.vmem_to_hbm [thread:$0]  %s408, 256, %s406, %s392, 128, 256, 8
        $region52: #{tpu_custom_call.1} parent=31 // pred_fallthru
          _
      $region32: #{tpu_custom_call.1} parent=5 // pred_fallthru
        _
      %p414 = scmp.le.s32.totalorder 2, %s16
      // Predicated region
      $region53: #{tpu_custom_call.1} parent=5 // pred_check
        %p415 = pneg %p414
      $region54: #{tpu_custom_call.1} parent=5 // pred_check_branch
        %417 = sbr.rel (%p415) target = $region56
      $region55: #{tpu_custom_call.1} parent=5 // pred_region
        %s418 = ssub.s32 %s16, 2
        // Predicated region
        $region57: #{tpu_custom_call.1} parent=55 // pred_check
          %p419 = pneg %p148
        $region58: #{tpu_custom_call.1} parent=55 // pred_check_branch
          %421 = sbr.rel (%p419) target = $region60
        $region59: #{tpu_custom_call.1} parent=55 // pred_region
          %s422 = sand.u32 %s133, 1
          %s423 = scalar_lea.sflag [#allocation5], %s422
          %s424 = sand.u32 %s133, 1
          %s425 = smul.addr %s424, 16
          %s426 = scalar_lea.vmem [#allocation8], %s425
          %427 = dma.done %s423, 256
        $region60: #{tpu_custom_call.1} parent=55 // pred_fallthru
          _
      $region56: #{tpu_custom_call.1} parent=5 // pred_fallthru
        _
    $region6: #{tpu_custom_call.1} parent=1 // loop_footer
      %s20 = sadd.s32 1, %s16
    $region7: #{tpu_custom_call.1} parent=1 // loop_footer_branch
      %15 = sbr.rel target = $region3
    $region8: #{tpu_custom_call.1} parent=1 // loop_exit
      _
    %428 = vsyncpa [#allocation4], 1
    %s429 = scalar_lea.sflag [#allocation4], 1
    %430 = vsyncpa %s429, 1
    %431 = vsyncpa [#allocation7], 1
    %s432 = scalar_lea.sflag [#allocation7], 1
    %433 = vsyncpa %s432, 1
    %434 = vsyncpa [#allocation5], 1
    %s435 = scalar_lea.sflag [#allocation5], 1
    %436 = vsyncpa %s435, 1

</llo_original>
